<compile_context>
chip_gen: v5e
topology: v5e:2x2
jax: 0.10.0
libtpu: 0.0.40
codegen_flags: <defaults>
</compile_context>

<pallas_src>
import jax
import jax.numpy as jnp
from jax.experimental import pallas as pl
from jax.experimental.pallas import tpu as pltpu


# ------------------------------ Pallas kernels ------------------------------

def _stats_kernel(x_ref, w_ref, sum_ref, sq_ref):
    """ConvT(2,2)-as-matmul; accumulate sublane-partial per-lane sum / sum-of-squares.

    No activation tensor is written to HBM (stats-only pass)."""
    @pl.when(pl.program_id(1) == 0)
    def _():
        sum_ref[...] = jnp.zeros_like(sum_ref)
        sq_ref[...] = jnp.zeros_like(sq_ref)

    acc = jnp.dot(x_ref[...], w_ref[...], preferred_element_type=jnp.float32)
    tm, nf = acc.shape
    a3 = acc.reshape(tm // 8, 8, nf)            # free reshape (leading dims only)
    psum = jnp.sum(a3, axis=0)                  # (8, Nf): pure-VPU vreg adds
    psq = jnp.sum(a3 * a3, axis=0)
    sum_ref[...] += psum[None, :, :]
    sq_ref[...] += psq[None, :, :]


def _conv_bn_relu_kernel(x_ref, w_ref, scale_ref, shift_ref, o_ref):
    """Recompute ConvT-as-matmul, apply folded BN affine (scale/shift), ReLU."""
    acc = jnp.dot(x_ref[...], w_ref[...], preferred_element_type=jnp.float32)
    z = acc * scale_ref[...] + shift_ref[...]
    o_ref[...] = jnp.maximum(z, 0.0).astype(o_ref.dtype)


# --------------------------------- helpers -----------------------------------

def _round_up(x, m):
    return (x + m - 1) // m * m


def _pick_tile(m, target):
    """Largest multiple of 8 that divides m and is <= target (fallback: 8)."""
    cap = min(target, m)
    cap -= cap % 8
    for cand in range(cap, 7, -8):
        if m % cand == 0:
            return cand
    return 8


# --------------------------------- wrapper ----------------------------------

def sub_conv_vertical_up(x_nchw, weight, bias, gamma, beta, *, eps=1e-5):
    """weight: (C_in, C_out, 2, 2) PyTorch ConvTranspose2d layout; x: NCHW."""
    del bias  # per-channel conv bias cancels exactly under training-mode BatchNorm
    # TODO(synk): BatchNorm running_mean / running_var buffer updates are not returned
    # (forward-output parity only).

    B, C_in, H, W = x_nchw.shape
    C_out = weight.shape[1]
    N = 4 * C_out
    M = B * H * W
    dt = jnp.float32

    # NCHW -> NHWC -> (M, C_in) rows (input is the smallest tensor in the pipeline).
    x = jnp.transpose(x_nchw, (0, 2, 3, 1)).reshape(M, C_in).astype(dt)

    # (C_in, C_out, kh, kw) -> (C_in, kh, kw, C_out) -> (C_in, 4*C_out).
    # Lane order within a pixel: lane = di*2*C_out + dj*C_out + co  (co innermost).
    w2 = jnp.transpose(weight, (0, 2, 3, 1)).reshape(C_in, N).astype(dt)

    # ---- lane-density planning: pack F pixels per 128-lane row; pad lanes if needed.
    if N % 128 == 0:
        F, Np = 1, N
    elif N < 128 and 128 % N == 0:
        F, Np = 128 // N, N
    elif N < 128:
        F, Np = 1, 128                      # zero-pad lanes up to a dense vreg row
    else:
        F, Np = 1, _round_up(N, 128)
    if Np > N:
        w2 = jnp.pad(w2, ((0, 0), (0, Np - N)))
    Kf, Nf = F * C_in, F * Np
    w_ld = jnp.kron(jnp.eye(F, dtype=dt), w2) if F > 1 else w2   # block-diagonal

    # ---- row padding & tile selection (VMEM-budget capped, target 2048 rows).
    Mf0 = -(-M // F)                        # cdiv
    bytes_per_row = 4 * (Kf + 2 * Nf)       # x block + double-buffered out block
    tm_cap = max(256, min(2048, (10 * 1024 * 1024 // bytes_per_row) // 8 * 8))
    if Mf0 <= tm_cap:
        Mf = _round_up(Mf0, 8)
        tm = Mf
    else:
        Mf = _round_up(Mf0, 256)
        tm = _pick_tile(Mf, tm_cap)
    Mp = Mf * F
    if Mp > M:
        # Zero rows contribute exactly 0 to sum and sum-of-squares (no bias folded in),
        # so statistics stay exact with the true count.
        x = jnp.pad(x, ((0, Mp - M), (0, 0)))
    x_ld = x.reshape(Mf, Kf)                # free reshape: F pixels per 128-lane row

    T = Mf // tm
    ncore = 2 if (T % 2 == 0 and T >= 2) else 1     # split stats across v7x's 2 TCs
    Tpc = T // ncore

    # ---- Pass 1: statistics only (no large intermediate written to HBM).
    s, q = pl.pallas_call(
        _stats_kernel,
        out_shape=(jax.ShapeDtypeStruct((ncore, 8, Nf), jnp.float32),
                   jax.ShapeDtypeStruct((ncore, 8, Nf), jnp.float32)),
        grid=(ncore, Tpc),
        in_specs=[pl.BlockSpec((tm, Kf), lambda c, i: (c * Tpc + i, 0)),
                  pl.BlockSpec((Kf, Nf), lambda c, i: (0, 0))],
        out_specs=(pl.BlockSpec((1, 8, Nf), lambda c, i: (c, 0, 0)),
                   pl.BlockSpec((1, 8, Nf), lambda c, i: (c, 0, 0))),
        compiler_params=pltpu.CompilerParams(
            dimension_semantics=("parallel", "arbitrary"),
            vmem_limit_bytes=32 * 1024 * 1024),
    )(x_ld, w_ld)

    # ---- Tiny per-channel math (O(C_out)); lane l (within a fold group) -> channel.
    s_lane = s.sum(axis=(0, 1))             # (Nf,)
    q_lane = q.sum(axis=(0, 1))
    s_ch = s_lane.reshape(F, Np)[:, :N].reshape(F, 4, C_out).sum(axis=(0, 1))
    q_ch = q_lane.reshape(F, Np)[:, :N].reshape(F, 4, C_out).sum(axis=(0, 1))
    inv_count = 1.0 / (4.0 * float(M))      # elements per channel = B * 2H * 2W
    mean = s_ch * inv_count
    var = jnp.maximum(q_ch * inv_count - mean * mean, 0.0)   # biased (PyTorch BN norm)
    inv_std = jax.lax.rsqrt(var + eps)
    scale_c = gamma.astype(jnp.float32) * inv_std
    shift_c = beta.astype(jnp.float32) - mean * scale_c
    pad = jnp.zeros((Np - N,), jnp.float32)
    scale_np = jnp.concatenate([jnp.tile(scale_c, 4), pad])
    shift_np = jnp.concatenate([jnp.tile(shift_c, 4), pad])
    scale_l = jnp.tile(scale_np, F).reshape(1, Nf)
    shift_l = jnp.tile(shift_np, F).reshape(1, Nf)

    # ---- Pass 2: recompute conv + BN affine + ReLU, write lane-dense output once.
    out = pl.pallas_call(
        _conv_bn_relu_kernel,
        out_shape=jax.ShapeDtypeStruct((Mf, Nf), jnp.float32),
        grid=(T,),
        in_specs=[pl.BlockSpec((tm, Kf), lambda i: (i, 0)),
                  pl.BlockSpec((Kf, Nf), lambda i: (0, 0)),
                  pl.BlockSpec((1, Nf), lambda i: (0, 0)),
                  pl.BlockSpec((1, Nf), lambda i: (0, 0))],
        out_specs=pl.BlockSpec((tm, Nf), lambda i: (i, 0)),
        compiler_params=pltpu.CompilerParams(
            dimension_semantics=("parallel",),
            vmem_limit_bytes=32 * 1024 * 1024),
    )(x_ld, w_ld, scale_l, shift_l)

    # ---- Unpack lane fold, drop padding, single (b,h,w,di,dj,co) -> NCHW transpose.
    out = out.reshape(Mf * F, Np)[:M, :N]
    out = (out.reshape(B, H, W, 2, 2, C_out)
              .transpose(0, 5, 1, 3, 2, 4)
              .reshape(B, C_out, 2 * H, 2 * W))
    return out


# ------------------------------ pure-JAX reference ---------------------------

def _reference(x_nchw, weight, bias, gamma, beta, eps=1e-5):
    B, C_in, H, W = x_nchw.shape
    C_out = weight.shape[1]
    y = jnp.einsum("bchw,cokl->bohwkl", x_nchw, weight)      # (B,Co,H,W,2,2)
    y = y.transpose(0, 1, 2, 4, 3, 5).reshape(B, C_out, 2 * H, 2 * W)
    y = y + bias[None, :, None, None]
    mean = y.mean(axis=(0, 2, 3), keepdims=True)
    var = ((y - mean) ** 2).mean(axis=(0, 2, 3), keepdims=True)  # biased
    z = (y - mean) / jnp.sqrt(var + eps)
    z = z * gamma[None, :, None, None] + beta[None, :, None, None]
    return jnp.maximum(z, 0.0)


# ----------------------------------- main ------------------------------------

if __name__ == "__main__":
    key = jax.random.PRNGKey(0)
    k_x, k_w, k_b = jax.random.split(key, 3)

    n_in, n_out = 4, 8
    B, H, W = 2, 16, 16

    x = jax.random.normal(k_x, (B, n_in, H, W), dtype=jnp.float32)
    # ConvTranspose2d weight: (in_channels, out_channels, kH, kW)
    weight = jax.random.normal(k_w, (n_in, n_out, 2, 2), dtype=jnp.float32) * 0.1
    bias = jax.random.normal(k_b, (n_out,), dtype=jnp.float32) * 0.1
    # BatchNorm2d default init
    gamma = jnp.ones((n_out,), dtype=jnp.float32)
    beta = jnp.zeros((n_out,), dtype=jnp.float32)

    run = jax.jit(sub_conv_vertical_up)
    out = jax.block_until_ready(run(x, weight, bias, gamma, beta))

    ref = _reference(x, weight, bias, gamma, beta)
    assert out.shape == (B, n_out, 2 * H, 2 * W), out.shape
    assert jnp.allclose(out, ref, atol=1e-4, rtol=1e-4), float(
        jnp.max(jnp.abs(out - ref)))

    print("KERNEL_OK")
</pallas_src>

<mosaic_0001>
module attributes {stable_mosaic.version = 11 : i64} {
  func.func @_stats_kernel(%arg0: i32, %arg1: i32, %arg2: memref<128x16xf32, #tpu.memory_space<vmem>>, %arg3: memref<16x128xf32, #tpu.memory_space<vmem>>, %arg4: memref<1x8x128xf32, #tpu.memory_space<vmem>>, %arg5: memref<1x8x128xf32, #tpu.memory_space<vmem>>) attributes {dimension_semantics = [#tpu.dimension_semantics<parallel>, #tpu.dimension_semantics<arbitrary>], iteration_bounds = array<i64: 1, 1>, scalar_prefetch = 0 : i64, scratch_operands = 0 : i64, tpu.core_type = #tpu.core_type<tc>, window_params = [{transform_indices = @transform_0, window_bounds = array<i64: 128, 16>}, {pipeline_mode = #tpu.pipeline_mode<synchronous>, transform_indices = @transform_1, window_bounds = array<i64: 16, 128>}, {transform_indices = @transform_2, window_bounds = array<i64: 1, 8, 128>}, {transform_indices = @transform_3, window_bounds = array<i64: 1, 8, 128>}]} {
    %c0_i32 = arith.constant 0 : i32
    %0 = arith.cmpi eq, %arg1, %c0_i32 : i32
    %1 = arith.extui %0 : i1 to i32
    %c0_i32_0 = arith.constant 0 : i32
    %2 = arith.cmpi ne, %1, %c0_i32_0 : i32
    scf.if %2 {
      %cst_18 = arith.constant 0.000000e+00 : f32
      %18 = vector.broadcast %cst_18 : f32 to vector<1x8x128xf32>
      %c0_19 = arith.constant 0 : index
      %c0_20 = arith.constant 0 : index
      %c0_21 = arith.constant 0 : index
      %19 = vector.load %arg4[%c0_19, %c0_20, %c0_21] : memref<1x8x128xf32, #tpu.memory_space<vmem>>, vector<1x8x128xf32>
      tpu.vector_store %arg4[%c0_19, %c0_20, %c0_21], %18 {strides = array<i32>} : memref<1x8x128xf32, #tpu.memory_space<vmem>>, vector<1x8x128xf32>,
      %cst_22 = arith.constant 0.000000e+00 : f32
      %20 = vector.broadcast %cst_22 : f32 to vector<1x8x128xf32>
      %c0_23 = arith.constant 0 : index
      %c0_24 = arith.constant 0 : index
      %c0_25 = arith.constant 0 : index
      %21 = vector.load %arg5[%c0_23, %c0_24, %c0_25] : memref<1x8x128xf32, #tpu.memory_space<vmem>>, vector<1x8x128xf32>
      tpu.vector_store %arg5[%c0_23, %c0_24, %c0_25], %20 {strides = array<i32>} : memref<1x8x128xf32, #tpu.memory_space<vmem>>, vector<1x8x128xf32>,
    } else {
    }
    %c0 = arith.constant 0 : index
    %c0_1 = arith.constant 0 : index
    %3 = vector.load %arg2[%c0, %c0_1] : memref<128x16xf32, #tpu.memory_space<vmem>>, vector<128x16xf32>
    %c0_2 = arith.constant 0 : index
    %c0_3 = arith.constant 0 : index
    %4 = vector.load %arg3[%c0_2, %c0_3] : memref<16x128xf32, #tpu.memory_space<vmem>>, vector<16x128xf32>
    %cst = arith.constant dense<0.000000e+00> : vector<128x128xf32>
    %5 = tpu.matmul %3, %4, %cst {dimension_numbers = #tpu.dot_dimension_numbers<[1], [0], [0], [1], [0, 0, 1, 1], [], []>} : vector<128x16xf32>, vector<16x128xf32>, vector<128x128xf32> -> vector<128x128xf32>
    %6 = vector.shape_cast %5 : vector<128x128xf32> to vector<16x8x128xf32>
    %cst_4 = arith.constant dense<0.000000e+00> : vector<8x128xf32>
    %7 = vector.multi_reduction <add>, %6, %cst_4 [0] : vector<16x8x128xf32> to vector<8x128xf32>
    %8 = arith.mulf %6, %6 : vector<16x8x128xf32>
    %cst_5 = arith.constant dense<0.000000e+00> : vector<8x128xf32>
    %9 = vector.multi_reduction <add>, %8, %cst_5 [0] : vector<16x8x128xf32> to vector<8x128xf32>
    %c0_6 = arith.constant 0 : index
    %c0_7 = arith.constant 0 : index
    %c0_8 = arith.constant 0 : index
    %10 = vector.load %arg4[%c0_6, %c0_7, %c0_8] : memref<1x8x128xf32, #tpu.memory_space<vmem>>, vector<1x8x128xf32>
    %11 = vector.shape_cast %7 : vector<8x128xf32> to vector<1x8x128xf32>
    %12 = arith.addf %10, %11 : vector<1x8x128xf32>
    %c0_9 = arith.constant 0 : index
    %c0_10 = arith.constant 0 : index
    %c0_11 = arith.constant 0 : index
    %13 = vector.load %arg4[%c0_9, %c0_10, %c0_11] : memref<1x8x128xf32, #tpu.memory_space<vmem>>, vector<1x8x128xf32>
    tpu.vector_store %arg4[%c0_9, %c0_10, %c0_11], %12 {strides = array<i32>} : memref<1x8x128xf32, #tpu.memory_space<vmem>>, vector<1x8x128xf32>,
    %c0_12 = arith.constant 0 : index
    %c0_13 = arith.constant 0 : index
    %c0_14 = arith.constant 0 : index
    %14 = vector.load %arg5[%c0_12, %c0_13, %c0_14] : memref<1x8x128xf32, #tpu.memory_space<vmem>>, vector<1x8x128xf32>
    %15 = vector.shape_cast %9 : vector<8x128xf32> to vector<1x8x128xf32>
    %16 = arith.addf %14, %15 : vector<1x8x128xf32>
    %c0_15 = arith.constant 0 : index
    %c0_16 = arith.constant 0 : index
    %c0_17 = arith.constant 0 : index
    %17 = vector.load %arg5[%c0_15, %c0_16, %c0_17] : memref<1x8x128xf32, #tpu.memory_space<vmem>>, vector<1x8x128xf32>
    tpu.vector_store %arg5[%c0_15, %c0_16, %c0_17], %16 {strides = array<i32>} : memref<1x8x128xf32, #tpu.memory_space<vmem>>, vector<1x8x128xf32>,
    return
  }
  func.func @transform_0(%arg0: i32, %arg1: i32) -> (i32, i32) {
    %c1_i32 = arith.constant 1 : i32
    %0 = arith.muli %arg0, %c1_i32 : i32
    %1 = arith.addi %0, %arg1 : i32
    %c0_i32 = arith.constant 0 : i32
    %c0_i32_0 = arith.constant 0 : i32
    return %1, %c0_i32 : i32, i32
  }
  func.func @transform_1(%arg0: i32, %arg1: i32) -> (i32, i32) {
    %c0_i32 = arith.constant 0 : i32
    %c0_i32_0 = arith.constant 0 : i32
    %c0_i32_1 = arith.constant 0 : i32
    return %c0_i32, %c0_i32_0 : i32, i32
  }
  func.func @transform_2(%arg0: i32, %arg1: i32) -> (i32, i32, i32) {
    %c0_i32 = arith.constant 0 : i32
    %c0_i32_0 = arith.constant 0 : i32
    %c0_i32_1 = arith.constant 0 : i32
    return %arg0, %c0_i32, %c0_i32_0 : i32, i32, i32
  }
  func.func @transform_3(%arg0: i32, %arg1: i32) -> (i32, i32, i32) {
    %c0_i32 = arith.constant 0 : i32
    %c0_i32_0 = arith.constant 0 : i32
    %c0_i32_1 = arith.constant 0 : i32
    return %arg0, %c0_i32, %c0_i32_0 : i32, i32, i32
  }
}

module attributes {stable_mosaic.version = 11 : i64} {
  func.func @_conv_bn_relu_kernel(%arg0: i32, %arg1: memref<128x16xf32, #tpu.memory_space<vmem>>, %arg2: memref<16x128xf32, #tpu.memory_space<vmem>>, %arg3: memref<1x128xf32, #tpu.memory_space<vmem>>, %arg4: memref<1x128xf32, #tpu.memory_space<vmem>>, %arg5: memref<128x128xf32, #tpu.memory_space<vmem>>) attributes {dimension_semantics = [#tpu.dimension_semantics<parallel>], iteration_bounds = array<i64: 1>, scalar_prefetch = 0 : i64, scratch_operands = 0 : i64, tpu.core_type = #tpu.core_type<tc>, window_params = [{transform_indices = @transform_0, window_bounds = array<i64: 128, 16>}, {pipeline_mode = #tpu.pipeline_mode<synchronous>, transform_indices = @transform_1, window_bounds = array<i64: 16, 128>}, {pipeline_mode = #tpu.pipeline_mode<synchronous>, transform_indices = @transform_2, window_bounds = array<i64: 1, 128>}, {pipeline_mode = #tpu.pipeline_mode<synchronous>, transform_indices = @transform_3, window_bounds = array<i64: 1, 128>}, {transform_indices = @transform_4, window_bounds = array<i64: 128, 128>}]} {
    %c0 = arith.constant 0 : index
    %c0_0 = arith.constant 0 : index
    %0 = vector.load %arg1[%c0, %c0_0] : memref<128x16xf32, #tpu.memory_space<vmem>>, vector<128x16xf32>
    %c0_1 = arith.constant 0 : index
    %c0_2 = arith.constant 0 : index
    %1 = vector.load %arg2[%c0_1, %c0_2] : memref<16x128xf32, #tpu.memory_space<vmem>>, vector<16x128xf32>
    %cst = arith.constant dense<0.000000e+00> : vector<128x128xf32>
    %2 = tpu.matmul %0, %1, %cst {dimension_numbers = #tpu.dot_dimension_numbers<[1], [0], [0], [1], [0, 0, 1, 1], [], []>} : vector<128x16xf32>, vector<16x128xf32>, vector<128x128xf32> -> vector<128x128xf32>
    %c0_3 = arith.constant 0 : index
    %c0_4 = arith.constant 0 : index
    %3 = vector.load %arg3[%c0_3, %c0_4] : memref<1x128xf32, #tpu.memory_space<vmem>>, vector<1x128xf32>
    %4 = vector.broadcast %3 : vector<1x128xf32> to vector<128x128xf32>
    %5 = arith.mulf %2, %4 : vector<128x128xf32>
    %c0_5 = arith.constant 0 : index
    %c0_6 = arith.constant 0 : index
    %6 = vector.load %arg4[%c0_5, %c0_6] : memref<1x128xf32, #tpu.memory_space<vmem>>, vector<1x128xf32>
    %7 = vector.broadcast %6 : vector<1x128xf32> to vector<128x128xf32>
    %8 = arith.addf %5, %7 : vector<128x128xf32>
    %cst_7 = arith.constant 0.000000e+00 : f32
    %9 = vector.broadcast %cst_7 : f32 to vector<128x128xf32>
    %10 = arith.maximumf %8, %9 : vector<128x128xf32>
    %c0_8 = arith.constant 0 : index
    %c0_9 = arith.constant 0 : index
    %11 = vector.load %arg5[%c0_8, %c0_9] : memref<128x128xf32, #tpu.memory_space<vmem>>, vector<128x128xf32>
    tpu.vector_store %arg5[%c0_8, %c0_9], %10 {strides = array<i32>} : memref<128x128xf32, #tpu.memory_space<vmem>>, vector<128x128xf32>,
    return
  }
  func.func @transform_0(%arg0: i32) -> (i32, i32) {
    %c0_i32 = arith.constant 0 : i32
    %c0_i32_0 = arith.constant 0 : i32
    return %arg0, %c0_i32 : i32, i32
  }
  func.func @transform_1(%arg0: i32) -> (i32, i32) {
    %c0_i32 = arith.constant 0 : i32
    %c0_i32_0 = arith.constant 0 : i32
    %c0_i32_1 = arith.constant 0 : i32
    return %c0_i32, %c0_i32_0 : i32, i32
  }
  func.func @transform_2(%arg0: i32) -> (i32, i32) {
    %c0_i32 = arith.constant 0 : i32
    %c0_i32_0 = arith.constant 0 : i32
    %c0_i32_1 = arith.constant 0 : i32
    return %c0_i32, %c0_i32_0 : i32, i32
  }
  func.func @transform_3(%arg0: i32) -> (i32, i32) {
    %c0_i32 = arith.constant 0 : i32
    %c0_i32_0 = arith.constant 0 : i32
    %c0_i32_1 = arith.constant 0 : i32
    return %c0_i32, %c0_i32_0 : i32, i32
  }
  func.func @transform_4(%arg0: i32) -> (i32, i32) {
    %c0_i32 = arith.constant 0 : i32
    %c0_i32_0 = arith.constant 0 : i32
    return %arg0, %c0_i32 : i32, i32
  }
}

</mosaic_0001>

<llo_original>
// kernel: mul.4
$region0: #{mul.4}
  %s0 = inlined_call_operand.hbm [shape: f32[4,2,2,8], index: 0, kind: input, shape index: {}]
  %s1 = inlined_call_operand.vmem [shape: f32[4,32], index: 1, kind: output, shape index: {}]
  $region1: #{mul.4} parent=0
    #allocation0 [shape = 'u8[8192]{0}', space=vmem, size = 0x2000, scoped, tag = 'operand span for operand 0']
    #allocation1 [shape = 's32[1]{0}', space=sflag, size = 0x4, scoped, tag = 'scoped memory for mul.4']
    #allocation2 [shape = 'u8[4096]{0}', space=vmem, size = 0x1000, scoped, tag = 'scoped mem for output reshape']
    #allocation3 [shape = 'u8[32768]{0}', space=vmem, size = 0x8000, scoped, tag = 'scoped mem for input reshape']
    %2 = vsyncpa [#allocation1], 0
    %4 = vsyncadd [#allocation1], 0
    %s6 = sshll.u32 %s0, 4
    %s7 = int_to_ptr.hbm [resolvable:$true] %s6
    %s8 = sshll.u32 [#allocation0], 4
    %s9 = int_to_ptr.vmem [resolvable:$true] %s8
    %11 = dma.hbm_to_vmem [thread:$0]  %s7, 256, %s9, [#allocation1]
    %13 = dma.done [#allocation1], 256
    %s15 = ssub.s32 4, 1
    %s16 = scalar_lea.vmem [#allocation0], 14
    %v17 = vld [vmem:[%s16] sm:%s15]
    %s18 = scalar_lea.vmem [#allocation3], 56
    %19 = vst [vmem:[%s18] sm:%s15] %v17
    %s20 = scalar_lea.vmem [#allocation0], 12
    %v21 = vld [vmem:[%s20] sm:%s15]
    %s22 = scalar_lea.vmem [#allocation3], 48
    %23 = vst [vmem:[%s22] sm:%s15] %v21
    %s24 = scalar_lea.vmem [#allocation0], 10
    %v25 = vld [vmem:[%s24] sm:%s15]
    %s26 = scalar_lea.vmem [#allocation3], 40
    %27 = vst [vmem:[%s26] sm:%s15] %v25
    %s28 = scalar_lea.vmem [#allocation0], 8
    %v29 = vld [vmem:[%s28] sm:%s15]
    %s30 = scalar_lea.vmem [#allocation3], 32
    %31 = vst [vmem:[%s30] sm:%s15] %v29
    %s32 = scalar_lea.vmem [#allocation0], 6
    %v33 = vld [vmem:[%s32] sm:%s15]
    %s34 = scalar_lea.vmem [#allocation3], 24
    %35 = vst [vmem:[%s34] sm:%s15] %v33
    %s36 = scalar_lea.vmem [#allocation0], 4
    %v37 = vld [vmem:[%s36] sm:%s15]
    %s38 = scalar_lea.vmem [#allocation3], 16
    %39 = vst [vmem:[%s38] sm:%s15] %v37
    %s40 = scalar_lea.vmem [#allocation0], 2
    %v41 = vld [vmem:[%s40] sm:%s15]
    %s42 = scalar_lea.vmem [#allocation3], 8
    %43 = vst [vmem:[%s42] sm:%s15] %v41
    %v44 = vld [vmem:[#allocation0] sm:%s15]
    %45 = vst [vmem:[#allocation3] sm:%s15] %v44
    %s46 = smov 3
    %v47 = vld [vmem:[#allocation3] ss:$16 sm:%s46]
    %s48 = smov 12
    %v49 = vld [vmem:[#allocation3] ss:$16 sm:%s48]
    %vm50 = vcmask 1043458
    %v51 = vsel %vm50, %v49, %v47
    %vm52 = vcmask 64512
    %53 = vst.msk [vmem:[#allocation2] sm:$0xf] %vm52, %v51
    %s54 = scalar_lea.vmem [#allocation3], 9
    %s55 = smov 3
    %v56 = vld [vmem:[%s54] ss:$16 sm:%s55]
    %s57 = scalar_lea.vmem [#allocation3], 9
    %s58 = smov 12
    %v59 = vld [vmem:[%s57] ss:$16 sm:%s58]
    %vm60 = vcmask 1043458
    %v61 = vsel %vm60, %v59, %v56
    %62 = vrot.lane.b32.xlu0 %v61, 24
    %v63 = vpop.permute.xlu0 %62
    %vm64 = vcmask 261312
    %65 = vst.msk [vmem:[#allocation2] sm:$0xf] %vm64, %v63
    %s66 = scalar_lea.vmem [#allocation3], 8
    %s67 = smov 3
    %v68 = vld [vmem:[%s66] ss:$16 sm:%s67]
    %s69 = scalar_lea.vmem [#allocation3], 8
    %s70 = smov 12
    %v71 = vld [vmem:[%s69] ss:$16 sm:%s70]
    %vm72 = vcmask 1043458
    %v73 = vsel %vm72, %v71, %v68
    %74 = vrot.lane.b32.xlu0 %v73, 16
    %v75 = vpop.permute.xlu0 %74
    %vm76 = vcmask 195712
    %77 = vst.msk [vmem:[#allocation2] sm:$0xf] %vm76, %v75
    %s78 = scalar_lea.vmem [#allocation3], 1
    %s79 = smov 3
    %v80 = vld [vmem:[%s78] ss:$16 sm:%s79]
    %s81 = scalar_lea.vmem [#allocation3], 1
    %s82 = smov 12
    %v83 = vld [vmem:[%s81] ss:$16 sm:%s82]
    %vm84 = vcmask 1043458
    %v85 = vsel %vm84, %v83, %v80
    %86 = vrot.lane.b32.xlu0 %v85, 8
    %v87 = vpop.permute.xlu0 %86
    %vm88 = vcmask 130112
    %89 = vst.msk [vmem:[#allocation2] sm:$0xf] %vm88, %v87
    %s91 = ssub.s32 16, 1
    %v92 = vld [vmem:[#allocation2] sm:%s91]
    %s94 = ssub.s32 16, 1
    %95 = vst [vmem:[%s1] sm:%s94] %v92
    %96 = vsyncpa [#allocation1], 1

// kernel: tile.25
$region0: #{tile.25}
  #allocation0 [shape = 's32[1]{0}', space=sflag, size = 0x4, scoped, tag = 'scoped memory for tile.25']
  %s0 = inlined_call_operand.vmem [shape: f32[8], index: 0, kind: input, shape index: {}]
  %s1 = inlined_call_operand.vmem [shape: f32[4,8], index: 1, kind: output, shape index: {}]
  // Predicated region
  $region2: #{tile.25} parent=0 // pred_check
    _
  $region3: #{tile.25} parent=0 // pred_check_branch
    %3 = sbr.rel (0) target = $region5
  $region4: #{tile.25} parent=0 // pred_region
    _
  $region5: #{tile.25} parent=0 // pred_fallthru
    _
  %v4 = vld [vmem:[%s0] ss:$0 sm:$0xff]
  %5 = vst [vmem:[%s1] sm:$0xf] %v4

// kernel: tile.33
$region0: #{tile.33}
  %s0 = inlined_call_operand.vmem [shape: f32[4,8], index: 0, kind: input, shape index: {}]
  %s1 = inlined_call_operand.vmem [shape: f32[32], index: 1, kind: output, shape index: {}]
  $region1: #{tile.33} parent=0
    #allocation0 [shape = 'u8[4096]{0}', space=vmem, size = 0x1000, scoped, tag = 'scoped mem for output reshape']
    #allocation1 [shape = 'u8[4096]{0}', space=vmem, size = 0x1000, scoped, tag = 'scoped mem for input reshape']
    %s3 = ssub.s32 16, 1
    %v4 = vld [vmem:[%s0] sm:%s3]
    %5 = vst [vmem:[#allocation1] sm:%s3] %v4
    %v6 = vld [vmem:[#allocation1] sm:$0x1]
    %vm7 = vcmask 64512
    %8 = vst.msk [vmem:[#allocation0] sm:$0x1] %vm7, %v6
    %s9 = scalar_lea.vmem [#allocation1], 3
    %v10 = vld [vmem:[%s9] sm:$0x1]
    %11 = vrot.lane.b32.xlu0 %v10, 24
    %v12 = vpop.permute.xlu0 %11
    %vm13 = vcmask 261312
    %14 = vst.msk [vmem:[#allocation0] sm:$0x1] %vm13, %v12
    %s15 = scalar_lea.vmem [#allocation1], 2
    %v16 = vld [vmem:[%s15] sm:$0x1]
    %17 = vrot.lane.b32.xlu0 %v16, 16
    %v18 = vpop.permute.xlu0 %17
    %vm19 = vcmask 195712
    %20 = vst.msk [vmem:[#allocation0] sm:$0x1] %vm19, %v18
    %s21 = scalar_lea.vmem [#allocation1], 1
    %v22 = vld [vmem:[%s21] sm:$0x1]
    %23 = vrot.lane.b32.xlu0 %v22, 8
    %v24 = vpop.permute.xlu0 %23
    %vm25 = vcmask 130112
    %26 = vst.msk [vmem:[#allocation0] sm:$0x1] %vm25, %v24
    %s28 = ssub.s32 2, 1
    %v29 = vld [vmem:[#allocation0] sm:%s28]
    %s31 = ssub.s32 2, 1
    %32 = vst [vmem:[%s1] sm:%s31] %v29

// kernel: tile.34
$region0: #{tile.34}
  #allocation0 [shape = 's32[1]{0}', space=sflag, size = 0x4, scoped, tag = 'scoped memory for tile.34']
  %s0 = inlined_call_operand.vmem [shape: f32[32], index: 0, kind: input, shape index: {}]
  %s1 = inlined_call_operand.vmem [shape: f32[4,32], index: 1, kind: output, shape index: {}]
  // Predicated region
  $region2: #{tile.34} parent=0 // pred_check
    _
  $region3: #{tile.34} parent=0 // pred_check_branch
    %3 = sbr.rel (0) target = $region5
  $region4: #{tile.34} parent=0 // pred_region
    _
  $region5: #{tile.34} parent=0 // pred_fallthru
    _
  %v4 = vld [vmem:[%s0] ss:$0 sm:$0xff]
  %5 = vst [vmem:[%s1] sm:$0xf] %v4

// kernel: tile.35
$region0: #{tile.35}
  %s0 = inlined_call_operand.vmem [shape: f32[4,32], index: 0, kind: input, shape index: {}]
  %s1 = inlined_call_operand.vmem [shape: f32[1,128], index: 1, kind: output, shape index: {}]
  $region1: #{tile.35} parent=0
    #allocation0 [shape = 'u8[4096]{0}', space=vmem, size = 0x1000, scoped, tag = 'scoped mem for output reshape']
    #allocation1 [shape = 'u8[4096]{0}', space=vmem, size = 0x1000, scoped, tag = 'scoped mem for input reshape']
    %s3 = ssub.s32 16, 1
    %v4 = vld [vmem:[%s0] sm:%s3]
    %5 = vst [vmem:[#allocation1] sm:%s3] %v4
    %v6 = vld [vmem:[#allocation1] sm:$0x1]
    %vm7 = vcmask 261120
    %8 = vst.msk [vmem:[#allocation0] sm:$0x1] %vm7, %v6
    %s9 = scalar_lea.vmem [#allocation1], 3
    %v10 = vld [vmem:[%s9] sm:$0x1]
    %11 = vrot.lane.b32.xlu0 %v10, 96
    %v12 = vpop.permute.xlu0 %11
    %vm13 = vcmask 1048320
    %14 = vst.msk [vmem:[#allocation0] sm:$0x1] %vm13, %v12
    %s15 = scalar_lea.vmem [#allocation1], 2
    %v16 = vld [vmem:[%s15] sm:$0x1]
    %17 = vrot.lane.b32.xlu0 %v16, 64
    %v18 = vpop.permute.xlu0 %17
    %vm19 = vcmask 785920
    %20 = vst.msk [vmem:[#allocation0] sm:$0x1] %vm19, %v18
    %s21 = scalar_lea.vmem [#allocation1], 1
    %v22 = vld [vmem:[%s21] sm:$0x1]
    %23 = vrot.lane.b32.xlu0 %v22, 32
    %v24 = vpop.permute.xlu0 %23
    %vm25 = vcmask 523520
    %26 = vst.msk [vmem:[#allocation0] sm:$0x1] %vm25, %v24
    %s28 = ssub.s32 2, 1
    %v29 = vld [vmem:[#allocation0] sm:%s28]
    %s31 = ssub.s32 2, 1
    %32 = vst [vmem:[%s1] sm:%s31] %v29

// kernel: sub_conv_vertical_up.2
$region0: #{sub_conv_vertical_up.2}
  #allocation0 [shape = 'u32[]', space=smem, size = 0x4, offset = 0x4, fixed_abs, tag = 'smem constant byte address 0x4 - core index']
  #allocation1 [shape = 'u32[72,128]{1,0:T(1,128)}', space=vmem, size = 0x9000, scoped, tag = 'internal scratch']
  %s0 = inlined_call_operand.vmem [shape: f32[128,16], index: 0, kind: input, shape index: {}]
  %s1 = inlined_call_operand.vmem [shape: f32[16,128], index: 1, kind: input, shape index: {}]
  %s2 = inlined_call_operand.vmem [shape: f32[1,8,128], index: 2, kind: output, shape index: {0}]
  %s3 = inlined_call_operand.vmem [shape: f32[1,8,128], index: 3, kind: output, shape index: {1}]
  %4 = xla_tuple %s2, %s3
  %s5 = sld [smem:[#allocation0]]
  $region30: #{sub_conv_vertical_up.2} parent=0
    _
  %s7 = ssub.s32 1, %s5
  %s8 = scalar_select 0, %s7, %s5
  // Predicated region
  $region2: #{sub_conv_vertical_up.2} parent=0 // pred_check
    _
  $region3: #{sub_conv_vertical_up.2} parent=0 // pred_check_branch
    %10 = sbr.rel (0) target = $region5
  $region4: #{sub_conv_vertical_up.2} parent=0 // pred_region
    %s11 = sadd.s32 0, 0
    %s12 = smul.u32 16, %s11
    %p13 = scmp.lt.s32.totalorder %s12, 15
    %s14 = scalar_select %p13, %s12, 15
    %s15 = smul.addr %s14, 8
    %s16 = scalar_lea.vmem %s0, %s15
    %s17 = sadd.s32 0, 0
    %s18 = smul.u32 16, %s17
  $region5: #{sub_conv_vertical_up.2} parent=0 // pred_fallthru
    _
  // Predicated region
  $region6: #{sub_conv_vertical_up.2} parent=0 // pred_check
    _
  $region7: #{sub_conv_vertical_up.2} parent=0 // pred_check_branch
    %20 = sbr.rel (0) target = $region9
  $region8: #{sub_conv_vertical_up.2} parent=0 // pred_region
    _
  $region9: #{sub_conv_vertical_up.2} parent=0 // pred_fallthru
    _
  %s21 = sadd.s32 0, 0
  %s22 = smul.u32 16, %s21
  %p23 = scmp.lt.s32.totalorder %s22, 15
  %s24 = scalar_select %p23, %s22, 15
  %s25 = smul.addr %s24, 8
  %s26 = scalar_lea.vmem %s0, %s25
  %s27 = sadd.s32 0, 0
  %s28 = smul.u32 16, %s27
  %p29 = scmp.lt.s32.totalorder %s28, 15
  %s30 = scalar_select %p29, %s28, 15
  %s31 = smul.addr %s30, 8
  %s32 = scalar_lea.vmem %s0, %s31
  %s33 = sadd.s32 0, 0
  %s34 = smul.u32 16, %s33
  %p35 = scmp.eq.s32.totalorder 0, 0
  // Predicated region
  $region10: #{sub_conv_vertical_up.2} parent=0 // pred_check
    %p36 = pneg %p35
  $region11: #{sub_conv_vertical_up.2} parent=0 // pred_check_branch
    %38 = sbr.rel (%p36) target = $region13
  $region12: #{sub_conv_vertical_up.2} parent=0 // pred_region
    %39 = vst [vmem:[%s2] sm:$0xff] 0.0
    %40 = vst [vmem:[%s3] sm:$0xff] 0.0
  $region13: #{sub_conv_vertical_up.2} parent=0 // pred_fallthru
    _
  %v41 = vld [vmem:[%s32] sm:$0xff]
  %v42 = vld [vmem:[%s32 + $0x8] sm:$0xff]
  %v43 = vld [vmem:[%s32 + $0x10] sm:$0xff]
  %v44 = vld [vmem:[%s32 + $0x18] sm:$0xff]
  %v45 = vld [vmem:[%s32 + $0x20] sm:$0xff]
  %v46 = vld [vmem:[%s32 + $0x28] sm:$0xff]
  %v47 = vld [vmem:[%s32 + $0x30] sm:$0xff]
  %v48 = vld [vmem:[%s32 + $0x38] sm:$0xff]
  %v49 = vld [vmem:[%s32 + $0x40] sm:$0xff]
  %v50 = vld [vmem:[%s32 + $0x48] sm:$0xff]
  %v51 = vld [vmem:[%s32 + $0x50] sm:$0xff]
  %v52 = vld [vmem:[%s32 + $0x58] sm:$0xff]
  %v53 = vld [vmem:[%s32 + $0x60] sm:$0xff]
  %v54 = vld [vmem:[%s32 + $0x68] sm:$0xff]
  %v55 = vld [vmem:[%s32 + $0x70] sm:$0xff]
  %v56 = vld [vmem:[%s32 + $0x78] sm:$0xff]
  %v57 = vld [vmem:[%s1] sm:$0xff]
  %v58 = vld [vmem:[%s1 + $0x8] sm:$0xff]
  %vm59 = vcmask 130048
  %v61 = vsel %vm59, %v41, 0
  %v64 = vsel %vm59, %v42, 0
  %v67 = vsel %vm59, %v43, 0
  %v70 = vsel %vm59, %v44, 0
  %v73 = vsel %vm59, %v45, 0
  %v76 = vsel %vm59, %v46, 0
  %v79 = vsel %vm59, %v47, 0
  %v82 = vsel %vm59, %v48, 0
  %v85 = vsel %vm59, %v49, 0
  %v88 = vsel %vm59, %v50, 0
  %v91 = vsel %vm59, %v51, 0
  %v94 = vsel %vm59, %v52, 0
  %v97 = vsel %vm59, %v53, 0
  %v100 = vsel %vm59, %v54, 0
  %v103 = vsel %vm59, %v55, 0
  %v106 = vsel %vm59, %v56, 0
  %108 = vmatpush.msra.mxu0 0.0
  %109 = vmatpush.msra.mxu0 0.0
  %110 = vmatpush.msra.mxu0 0.0
  %111 = vmatpush.msra.mxu0 0.0
  %112 = vmatpush.msra.mxu0 0.0
  %113 = vmatpush.msra.mxu0 0.0
  %114 = vmatpush.msra.mxu0 0.0
  %115 = vmatpush.msra.mxu0 0.0
  %116 = vmatpush.msra.mxu0 0.0
  %117 = vmatpush.msra.mxu0 0.0
  %118 = vmatpush.msra.mxu0 0.0
  %119 = vmatpush.msra.mxu0 0.0
  %120 = vmatpush.msra.mxu0 0.0
  %121 = vmatpush.msra.mxu0 0.0
  %122 = vmatpush.msra.mxu0 %v58
  %123 = vmatpush.msra.mxu0 %v57
  %124 = vmatmul.f32.gmra.mxu0 %v61
  %v125 = vpop.f32.mrf.mxu0
  %v126 = vadd.f32 0.0, %v125
  %127 = vmatmul.f32.gmra.mxu0 %v64
  %v128 = vpop.f32.mrf.mxu0
  %v129 = vadd.f32 0.0, %v128
  %130 = vmatmul.f32.gmra.mxu0 %v67
  %v131 = vpop.f32.mrf.mxu0
  %v132 = vadd.f32 0.0, %v131
  %133 = vmatmul.f32.gmra.mxu0 %v70
  %v134 = vpop.f32.mrf.mxu0
  %v135 = vadd.f32 0.0, %v134
  %136 = vmatmul.f32.gmra.mxu0 %v73
  %v137 = vpop.f32.mrf.mxu0
  %v138 = vadd.f32 0.0, %v137
  %139 = vmatmul.f32.gmra.mxu0 %v76
  %v140 = vpop.f32.mrf.mxu0
  %v141 = vadd.f32 0.0, %v140
  %142 = vmatmul.f32.gmra.mxu0 %v79
  %v143 = vpop.f32.mrf.mxu0
  %v144 = vadd.f32 0.0, %v143
  %145 = vmatmul.f32.gmra.mxu0 %v82
  %v146 = vpop.f32.mrf.mxu0
  %v147 = vadd.f32 0.0, %v146
  %148 = vmatmul.f32.gmra.mxu0 %v85
  %v149 = vpop.f32.mrf.mxu0
  %v150 = vadd.f32 0.0, %v149
  %151 = vmatmul.f32.gmra.mxu0 %v88
  %v152 = vpop.f32.mrf.mxu0
  %v153 = vadd.f32 0.0, %v152
  %154 = vmatmul.f32.gmra.mxu0 %v91
  %v155 = vpop.f32.mrf.mxu0
  %v156 = vadd.f32 0.0, %v155
  %157 = vmatmul.f32.gmra.mxu0 %v94
  %v158 = vpop.f32.mrf.mxu0
  %v159 = vadd.f32 0.0, %v158
  %160 = vmatmul.f32.gmra.mxu0 %v97
  %v161 = vpop.f32.mrf.mxu0
  %v162 = vadd.f32 0.0, %v161
  %163 = vmatmul.f32.gmra.mxu0 %v100
  %v164 = vpop.f32.mrf.mxu0
  %v165 = vadd.f32 0.0, %v164
  %166 = vmatmul.f32.gmra.mxu0 %v103
  %v167 = vpop.f32.mrf.mxu0
  %v168 = vadd.f32 0.0, %v167
  %169 = vmatmul.f32.gmra.mxu0 %v106
  %v170 = vpop.f32.mrf.mxu0
  %v171 = vadd.f32 0.0, %v170
  %172 = vdwg.mxu0
  %v173 = vadd.f32 %v126, %v129
  %v174 = vadd.f32 %v173, %v132
  %v175 = vadd.f32 %v174, %v135
  %v176 = vadd.f32 %v175, %v138
  %v177 = vadd.f32 %v176, %v141
  %v178 = vadd.f32 %v177, %v144
  %v179 = vadd.f32 %v178, %v147
  %v180 = vadd.f32 %v179, %v150
  %v181 = vadd.f32 %v180, %v153
  %v182 = vadd.f32 %v181, %v156
  %v183 = vadd.f32 %v182, %v159
  %v184 = vadd.f32 %v183, %v162
  %v185 = vadd.f32 %v184, %v165
  %v186 = vadd.f32 %v185, %v168
  %v187 = vadd.f32 %v186, %v171
  %v188 = vmul.f32 %v126, %v126
  %v189 = vmul.f32 %v129, %v129
  %v190 = vmul.f32 %v132, %v132
  %v191 = vmul.f32 %v135, %v135
  %v192 = vmul.f32 %v138, %v138
  %v193 = vmul.f32 %v141, %v141
  %v194 = vmul.f32 %v144, %v144
  %v195 = vmul.f32 %v147, %v147
  %v196 = vmul.f32 %v150, %v150
  %v197 = vmul.f32 %v153, %v153
  %v198 = vmul.f32 %v156, %v156
  %v199 = vmul.f32 %v159, %v159
  %v200 = vmul.f32 %v162, %v162
  %v201 = vmul.f32 %v165, %v165
  %v202 = vmul.f32 %v168, %v168
  %v203 = vmul.f32 %v171, %v171
  %v204 = vadd.f32 %v188, %v189
  %v205 = vadd.f32 %v204, %v190
  %v206 = vadd.f32 %v205, %v191
  %v207 = vadd.f32 %v206, %v192
  %v208 = vadd.f32 %v207, %v193
  %v209 = vadd.f32 %v208, %v194
  %v210 = vadd.f32 %v209, %v195
  %v211 = vadd.f32 %v210, %v196
  %v212 = vadd.f32 %v211, %v197
  %v213 = vadd.f32 %v212, %v198
  %v214 = vadd.f32 %v213, %v199
  %v215 = vadd.f32 %v214, %v200
  %v216 = vadd.f32 %v215, %v201
  %v217 = vadd.f32 %v216, %v202
  %v218 = vadd.f32 %v217, %v203
  %v219 = vld [vmem:[%s2] sm:$0xff]
  %v220 = vadd.f32 %v219, %v187
  %221 = vst [vmem:[%s2] sm:$0xff] %v220
  %v222 = vld [vmem:[%s3] sm:$0xff]
  %v223 = vadd.f32 %v222, %v218
  %224 = vst [vmem:[%s3] sm:$0xff] %v223
  // Predicated region
  $region14: #{sub_conv_vertical_up.2} parent=0 // pred_check
    _
  $region15: #{sub_conv_vertical_up.2} parent=0 // pred_check_branch
    %226 = sbr.rel (0) target = $region17
  $region16: #{sub_conv_vertical_up.2} parent=0 // pred_region
    _
  $region17: #{sub_conv_vertical_up.2} parent=0 // pred_fallthru
    _
  // Predicated region
  $region18: #{sub_conv_vertical_up.2} parent=0 // pred_check
    _
  $region19: #{sub_conv_vertical_up.2} parent=0 // pred_check_branch
    %228 = sbr.rel (0) target = $region21
  $region20: #{sub_conv_vertical_up.2} parent=0 // pred_region
    _
  $region21: #{sub_conv_vertical_up.2} parent=0 // pred_fallthru
    _
  // Predicated region
  $region22: #{sub_conv_vertical_up.2} parent=0 // pred_check
    _
  $region23: #{sub_conv_vertical_up.2} parent=0 // pred_check_branch
    %230 = sbr.rel (0) target = $region25
  $region24: #{sub_conv_vertical_up.2} parent=0 // pred_region
    _
  $region25: #{sub_conv_vertical_up.2} parent=0 // pred_fallthru
    _
  // Predicated region
  $region26: #{sub_conv_vertical_up.2} parent=0 // pred_check
    _
  $region27: #{sub_conv_vertical_up.2} parent=0 // pred_check_branch
    %232 = sbr.rel (0) target = $region29
  $region28: #{sub_conv_vertical_up.2} parent=0 // pred_region
    _
  $region29: #{sub_conv_vertical_up.2} parent=0 // pred_fallthru
    _

// kernel: sub_conv_vertical_up.3
$region0: #{sub_conv_vertical_up.3}
  #allocation0 [shape = 'u32[]', space=smem, size = 0x4, offset = 0x4, fixed_abs, tag = 'smem constant byte address 0x4 - core index']
  #allocation1 [shape = 'u32[72,128]{1,0:T(1,128)}', space=vmem, size = 0x9000, scoped, tag = 'internal scratch']
  %s0 = inlined_call_operand.vmem [shape: f32[128,16], index: 0, kind: input, shape index: {}]
  %s1 = inlined_call_operand.vmem [shape: f32[16,128], index: 1, kind: input, shape index: {}]
  %s2 = inlined_call_operand.vmem [shape: f32[1,128], index: 2, kind: input, shape index: {}]
  %s3 = inlined_call_operand.vmem [shape: f32[1,128], index: 3, kind: input, shape index: {}]
  %s4 = inlined_call_operand.vmem [shape: f32[128,128], index: 4, kind: output, shape index: {}]
  %s5 = sld [smem:[#allocation0]]
  $region26: #{sub_conv_vertical_up.3} parent=0
    _
  %s7 = ssub.s32 1, %s5
  %s8 = scalar_select 0, %s7, %s5
  // Predicated region
  $region2: #{sub_conv_vertical_up.3} parent=0 // pred_check
    _
  $region3: #{sub_conv_vertical_up.3} parent=0 // pred_check_branch
    %10 = sbr.rel (0) target = $region5
  $region4: #{sub_conv_vertical_up.3} parent=0 // pred_region
    _
  $region5: #{sub_conv_vertical_up.3} parent=0 // pred_fallthru
    _
  // Predicated region
  $region6: #{sub_conv_vertical_up.3} parent=0 // pred_check
    _
  $region7: #{sub_conv_vertical_up.3} parent=0 // pred_check_branch
    %12 = sbr.rel (0) target = $region9
  $region8: #{sub_conv_vertical_up.3} parent=0 // pred_region
    _
  $region9: #{sub_conv_vertical_up.3} parent=0 // pred_fallthru
    _
  // Predicated region
  $region10: #{sub_conv_vertical_up.3} parent=0 // pred_check
    _
  $region11: #{sub_conv_vertical_up.3} parent=0 // pred_check_branch
    %14 = sbr.rel (0) target = $region13
  $region12: #{sub_conv_vertical_up.3} parent=0 // pred_region
    _
  $region13: #{sub_conv_vertical_up.3} parent=0 // pred_fallthru
    _
  // Predicated region
  $region14: #{sub_conv_vertical_up.3} parent=0 // pred_check
    _
  $region15: #{sub_conv_vertical_up.3} parent=0 // pred_check_branch
    %16 = sbr.rel (0) target = $region17
  $region16: #{sub_conv_vertical_up.3} parent=0 // pred_region
    _
  $region17: #{sub_conv_vertical_up.3} parent=0 // pred_fallthru
    _
  %v17 = vld [vmem:[%s0] sm:$0xff]
  %v18 = vld [vmem:[%s0 + $0x8] sm:$0xff]
  %v19 = vld [vmem:[%s0 + $0x10] sm:$0xff]
  %v20 = vld [vmem:[%s0 + $0x18] sm:$0xff]
  %v21 = vld [vmem:[%s0 + $0x20] sm:$0xff]
  %v22 = vld [vmem:[%s0 + $0x28] sm:$0xff]
  %v23 = vld [vmem:[%s0 + $0x30] sm:$0xff]
  %v24 = vld [vmem:[%s0 + $0x38] sm:$0xff]
  %v25 = vld [vmem:[%s0 + $0x40] sm:$0xff]
  %v26 = vld [vmem:[%s0 + $0x48] sm:$0xff]
  %v27 = vld [vmem:[%s0 + $0x50] sm:$0xff]
  %v28 = vld [vmem:[%s0 + $0x58] sm:$0xff]
  %v29 = vld [vmem:[%s0 + $0x60] sm:$0xff]
  %v30 = vld [vmem:[%s0 + $0x68] sm:$0xff]
  %v31 = vld [vmem:[%s0 + $0x70] sm:$0xff]
  %v32 = vld [vmem:[%s0 + $0x78] sm:$0xff]
  %v33 = vld [vmem:[%s1] sm:$0xff]
  %v34 = vld [vmem:[%s1 + $0x8] sm:$0xff]
  %vm35 = vcmask 130048
  %v37 = vsel %vm35, %v17, 0
  %v40 = vsel %vm35, %v18, 0
  %v43 = vsel %vm35, %v19, 0
  %v46 = vsel %vm35, %v20, 0
  %v49 = vsel %vm35, %v21, 0
  %v52 = vsel %vm35, %v22, 0
  %v55 = vsel %vm35, %v23, 0
  %v58 = vsel %vm35, %v24, 0
  %v61 = vsel %vm35, %v25, 0
  %v64 = vsel %vm35, %v26, 0
  %v67 = vsel %vm35, %v27, 0
  %v70 = vsel %vm35, %v28, 0
  %v73 = vsel %vm35, %v29, 0
  %v76 = vsel %vm35, %v30, 0
  %v79 = vsel %vm35, %v31, 0
  %v82 = vsel %vm35, %v32, 0
  %84 = vmatpush.msra.mxu0 0.0
  %85 = vmatpush.msra.mxu0 0.0
  %86 = vmatpush.msra.mxu0 0.0
  %87 = vmatpush.msra.mxu0 0.0
  %88 = vmatpush.msra.mxu0 0.0
  %89 = vmatpush.msra.mxu0 0.0
  %90 = vmatpush.msra.mxu0 0.0
  %91 = vmatpush.msra.mxu0 0.0
  %92 = vmatpush.msra.mxu0 0.0
  %93 = vmatpush.msra.mxu0 0.0
  %94 = vmatpush.msra.mxu0 0.0
  %95 = vmatpush.msra.mxu0 0.0
  %96 = vmatpush.msra.mxu0 0.0
  %97 = vmatpush.msra.mxu0 0.0
  %98 = vmatpush.msra.mxu0 %v34
  %99 = vmatpush.msra.mxu0 %v33
  %100 = vmatmul.f32.gmra.mxu0 %v37
  %v101 = vpop.f32.mrf.mxu0
  %v102 = vadd.f32 0.0, %v101
  %103 = vmatmul.f32.gmra.mxu0 %v40
  %v104 = vpop.f32.mrf.mxu0
  %v105 = vadd.f32 0.0, %v104
  %106 = vmatmul.f32.gmra.mxu0 %v43
  %v107 = vpop.f32.mrf.mxu0
  %v108 = vadd.f32 0.0, %v107
  %109 = vmatmul.f32.gmra.mxu0 %v46
  %v110 = vpop.f32.mrf.mxu0
  %v111 = vadd.f32 0.0, %v110
  %112 = vmatmul.f32.gmra.mxu0 %v49
  %v113 = vpop.f32.mrf.mxu0
  %v114 = vadd.f32 0.0, %v113
  %115 = vmatmul.f32.gmra.mxu0 %v52
  %v116 = vpop.f32.mrf.mxu0
  %v117 = vadd.f32 0.0, %v116
  %118 = vmatmul.f32.gmra.mxu0 %v55
  %v119 = vpop.f32.mrf.mxu0
  %v120 = vadd.f32 0.0, %v119
  %121 = vmatmul.f32.gmra.mxu0 %v58
  %v122 = vpop.f32.mrf.mxu0
  %v123 = vadd.f32 0.0, %v122
  %124 = vmatmul.f32.gmra.mxu0 %v61
  %v125 = vpop.f32.mrf.mxu0
  %v126 = vadd.f32 0.0, %v125
  %127 = vmatmul.f32.gmra.mxu0 %v64
  %v128 = vpop.f32.mrf.mxu0
  %v129 = vadd.f32 0.0, %v128
  %130 = vmatmul.f32.gmra.mxu0 %v67
  %v131 = vpop.f32.mrf.mxu0
  %v132 = vadd.f32 0.0, %v131
  %133 = vmatmul.f32.gmra.mxu0 %v70
  %v134 = vpop.f32.mrf.mxu0
  %v135 = vadd.f32 0.0, %v134
  %136 = vmatmul.f32.gmra.mxu0 %v73
  %v137 = vpop.f32.mrf.mxu0
  %v138 = vadd.f32 0.0, %v137
  %139 = vmatmul.f32.gmra.mxu0 %v76
  %v140 = vpop.f32.mrf.mxu0
  %v141 = vadd.f32 0.0, %v140
  %142 = vmatmul.f32.gmra.mxu0 %v79
  %v143 = vpop.f32.mrf.mxu0
  %v144 = vadd.f32 0.0, %v143
  %145 = vmatmul.f32.gmra.mxu0 %v82
  %v146 = vpop.f32.mrf.mxu0
  %v147 = vadd.f32 0.0, %v146
  %148 = vdwg.mxu0
  %v149 = vld [vmem:[%s2] sm:$0x1]
  %v151 = vperm.slane %v149, 0
  %v153 = vmul.f32 %v102, %v151
  %v154 = vmul.f32 %v105, %v151
  %v155 = vmul.f32 %v108, %v151
  %v156 = vmul.f32 %v111, %v151
  %v157 = vmul.f32 %v114, %v151
  %v158 = vmul.f32 %v117, %v151
  %v159 = vmul.f32 %v120, %v151
  %v160 = vmul.f32 %v123, %v151
  %v161 = vmul.f32 %v126, %v151
  %v162 = vmul.f32 %v129, %v151
  %v163 = vmul.f32 %v132, %v151
  %v164 = vmul.f32 %v135, %v151
  %v165 = vmul.f32 %v138, %v151
  %v166 = vmul.f32 %v141, %v151
  %v167 = vmul.f32 %v144, %v151
  %v168 = vmul.f32 %v147, %v151
  %v169 = vld [vmem:[%s3] sm:$0x1]
  %v171 = vperm.slane %v169, 0
  %v173 = vadd.f32 %v153, %v171
  %v174 = vadd.f32 %v154, %v171
  %v175 = vadd.f32 %v155, %v171
  %v176 = vadd.f32 %v156, %v171
  %v177 = vadd.f32 %v157, %v171
  %v178 = vadd.f32 %v158, %v171
  %v179 = vadd.f32 %v159, %v171
  %v180 = vadd.f32 %v160, %v171
  %v181 = vadd.f32 %v161, %v171
  %v182 = vadd.f32 %v162, %v171
  %v183 = vadd.f32 %v163, %v171
  %v184 = vadd.f32 %v164, %v171
  %v185 = vadd.f32 %v165, %v171
  %v186 = vadd.f32 %v166, %v171
  %v187 = vadd.f32 %v167, %v171
  %v188 = vadd.f32 %v168, %v171
  %v189 = vmax.f32 %v173, 0.0
  %v190 = vmax.f32 %v174, 0.0
  %v191 = vmax.f32 %v175, 0.0
  %v192 = vmax.f32 %v176, 0.0
  %v193 = vmax.f32 %v177, 0.0
  %v194 = vmax.f32 %v178, 0.0
  %v195 = vmax.f32 %v179, 0.0
  %v196 = vmax.f32 %v180, 0.0
  %v197 = vmax.f32 %v181, 0.0
  %v198 = vmax.f32 %v182, 0.0
  %v199 = vmax.f32 %v183, 0.0
  %v200 = vmax.f32 %v184, 0.0
  %v201 = vmax.f32 %v185, 0.0
  %v202 = vmax.f32 %v186, 0.0
  %v203 = vmax.f32 %v187, 0.0
  %v204 = vmax.f32 %v188, 0.0
  %205 = vst [vmem:[%s4] sm:$0xff] %v189
  %206 = vst [vmem:[%s4 + $0x8] sm:$0xff] %v190
  %207 = vst [vmem:[%s4 + $0x10] sm:$0xff] %v191
  %208 = vst [vmem:[%s4 + $0x18] sm:$0xff] %v192
  %209 = vst [vmem:[%s4 + $0x20] sm:$0xff] %v193
  %210 = vst [vmem:[%s4 + $0x28] sm:$0xff] %v194
  %211 = vst [vmem:[%s4 + $0x30] sm:$0xff] %v195
  %212 = vst [vmem:[%s4 + $0x38] sm:$0xff] %v196
  %213 = vst [vmem:[%s4 + $0x40] sm:$0xff] %v197
  %214 = vst [vmem:[%s4 + $0x48] sm:$0xff] %v198
  %215 = vst [vmem:[%s4 + $0x50] sm:$0xff] %v199
  %216 = vst [vmem:[%s4 + $0x58] sm:$0xff] %v200
  %217 = vst [vmem:[%s4 + $0x60] sm:$0xff] %v201
  %218 = vst [vmem:[%s4 + $0x68] sm:$0xff] %v202
  %219 = vst [vmem:[%s4 + $0x70] sm:$0xff] %v203
  %220 = vst [vmem:[%s4 + $0x78] sm:$0xff] %v204
  // Predicated region
  $region18: #{sub_conv_vertical_up.3} parent=0 // pred_check
    _
  $region19: #{sub_conv_vertical_up.3} parent=0 // pred_check_branch
    %222 = sbr.rel (0) target = $region21
  $region20: #{sub_conv_vertical_up.3} parent=0 // pred_region
    _
  $region21: #{sub_conv_vertical_up.3} parent=0 // pred_fallthru
    _
  // Predicated region
  $region22: #{sub_conv_vertical_up.3} parent=0 // pred_check
    _
  $region23: #{sub_conv_vertical_up.3} parent=0 // pred_check_branch
    %224 = sbr.rel (0) target = $region25
  $region24: #{sub_conv_vertical_up.3} parent=0 // pred_region
    _
  $region25: #{sub_conv_vertical_up.3} parent=0 // pred_fallthru
    _

</llo_original>
